<compile_context>
chip_gen: v7x
topology: tpu7x:2x2x1
jax: 0.10.0
libtpu: 0.0.40
codegen_flags: <defaults>
</compile_context>

<pallas_src>
import functools

import jax
import jax.numpy as jnp
from jax.experimental import pallas as pl
from jax.experimental.pallas import tpu as pltpu


_VMEM_LIMIT = 40 * 1024 * 1024     # scoped VMEM ceiling: safe on v5e/v6e (128 MiB) and v7x (64 MiB)
_BLOCK_BYTES_1S = 4 << 20          # per-stream f32 block budget, single-input kernels
_BLOCK_BYTES_2S = 3 << 20          # per-stream f32 block budget, two-input kernels
_FLAT_LANES = 512                  # lane width of the flattened sum/mean slab
_PAD_X = -1.0e4                    # logit pad value: focal loss is exactly 0 there (t=0)


def _cdiv(a, b):
    return -(-a // b)


def _ceil_to(a, m):
    return _cdiv(a, m) * m


# ----------------------------------------------------------------------------- math


def _recip(d):
    """1/d via approx EUP reciprocal + 2 Newton steps (VPU): ~f32 accurate, no divide."""
    r = pl.reciprocal(d, approx=True)
    r = r * (2.0 - d * r)
    r = r * (2.0 - d * r)
    return r


def _pow_gamma(z, gamma):
    """z**gamma with EUP-cheap specializations for common focal gammas."""
    if gamma == 0.0:
        return jnp.ones_like(z)
    if gamma == 0.5:
        return jnp.sqrt(z)
    if gamma == 1.0:
        return z
    if gamma == 1.5:
        return z * jnp.sqrt(z)
    if gamma == 2.0:
        return z * z
    if gamma == 2.5:
        return z * z * jnp.sqrt(z)
    if gamma == 3.0:
        return z * z * z
    if float(gamma) == int(gamma) and 0 <= int(gamma) <= 8:
        r = jnp.ones_like(z)
        for _ in range(int(gamma)):
            r = r * z
        return r
    return z ** gamma  # generic fallback (exp/log on EUP)


def _focal_binary(x, t_one, gamma, alpha):
    """Elementwise focal loss for a constant binary target (t = 1 if t_one else 0)."""
    e = jnp.exp(-jnp.abs(x))
    pos = x >= 0.0
    if t_one:
        bce = jnp.maximum(x, 0.0) - x + jnp.log1p(e)       # stable BCE-with-logits, t=1
        num = jnp.where(pos, 1.0, e)
        w = alpha
    else:
        bce = jnp.maximum(x, 0.0) + jnp.log1p(e)            # stable BCE-with-logits, t=0
        num = jnp.where(pos, e, 1.0)
        w = 1.0 - alpha
    p = num * _recip(1.0 + e)                                # == exp(-bce), no 2nd exp / divide
    loss = _pow_gamma(1.0 - p, gamma) * bce
    if alpha > 0.0:
        loss = loss * w
    return loss


def _focal_dense(x, t, gamma, alpha):
    """Elementwise focal loss for arbitrary (float) targets."""
    e = jnp.exp(-jnp.abs(x))
    bce = jnp.maximum(x, 0.0) - x * t + jnp.log1p(e)
    p = jnp.exp(-bce)
    loss = _pow_gamma(1.0 - p, gamma) * bce
    if alpha > 0.0:
        loss = loss * (t * alpha + (1.0 - t) * (1.0 - alpha))
    return loss


# --------------------------------------------------------------------------- kernels


def _flat_sum_kernel(*refs, elem_fn, n_rows_valid, bpp):
    """Lane-dense flattened reduction into a resident (1, 8, L) accumulator per part."""
    o_ref = refs[-1]
    in_refs = refs[:-1]
    j = pl.program_id(1)

    @pl.when(j == 0)
    def _():
        o_ref[...] = jnp.zeros_like(o_ref)

    vals = [r[...].astype(jnp.float32) for r in in_refs]
    loss = elem_fn(*vals)                                    # (tf, L)
    tf, L = loss.shape
    start = (pl.program_id(0) * bpp + j) * tf                # first slab row of this block

    @pl.when(start + tf <= n_rows_valid)                     # common case: no masking cost
    def _():
        o_ref[...] += jnp.sum(loss.reshape(tf // 8, 8, L), axis=0)[None]

    @pl.when(start + tf > n_rows_valid)                      # ragged / duplicated block
    def _():
        rows = start + jax.lax.broadcasted_iota(jnp.int32, (tf, 1), 0)
        masked = jnp.where(rows < n_rows_valid, loss, 0.0)
        o_ref[...] += jnp.sum(masked.reshape(tf // 8, 8, L), axis=0)[None]


def _rows_f0_kernel(x_ref, o_ref, *, gamma, alpha):
    """reduction='none', one-hot targets: per-row sums of the t=0 loss (target-free)."""
    x = x_ref[...].astype(jnp.float32)                       # (tm, c)
    tm, c = x.shape
    loss = _focal_binary(x, False, gamma, alpha)
    o_ref[...] = jnp.sum(loss.reshape(tm // 128, 128, c), axis=-1)[None]


def _rows_dense_kernel(x_ref, t_ref, o_ref, *, gamma, alpha):
    """reduction='none', dense float targets: per-row loss sums (lane-dense output)."""
    x = x_ref[...].astype(jnp.float32)
    t = t_ref[...].astype(jnp.float32)
    tm, c = x.shape
    loss = _focal_dense(x, t, gamma, alpha)
    o_ref[...] = jnp.sum(loss.reshape(tm // 128, 128, c), axis=-1)[None]


def _corr_map_kernel(xp_ref, o_ref, *, gamma, alpha, n_valid, rb):
    """Per-row correction f(x_pos, t=1) - f(x_pos, t=0); padded rows/lanes -> 0."""
    x = xp_ref[...].astype(jnp.float32)                      # (rb, 128)
    corr = (_focal_binary(x, True, gamma, alpha)
            - _focal_binary(x, False, gamma, alpha))
    rows = pl.program_id(0) * rb + jax.lax.broadcasted_iota(jnp.int32, (rb, 1), 0)
    lanes = jax.lax.broadcasted_iota(jnp.int32, (1, 128), 1)
    ok = (rows * 128 + lanes) < n_valid
    o_ref[...] = jnp.where(ok, corr, 0.0)


# -------------------------------------------------------------------------- wrappers


def _pad_rows(a, rows, fill=0):
    if a.shape[0] >= rows:
        return a
    pad = jnp.full((rows - a.shape[0],) + a.shape[1:], fill, dtype=a.dtype)
    return jnp.concatenate([a, pad], axis=0)


def _row_tile(n, c, streams):
    """Row tile (multiple of 128, byte-budget driven, never exceeding n)."""
    budget = _BLOCK_BYTES_1S if streams == 1 else _BLOCK_BYTES_2S
    per_row = 4 * max(int(c), 1)                  # f32 working-set bytes per row
    tm = max(128, (budget // per_row) // 128 * 128)
    tm = min(tm, (n // 128) * 128)                # callers guarantee n >= 128 here
    return tm, _cdiv(n, tm)


def _loss_per_row(inputs, targets, gamma, alpha):
    """reduction='none' row sums. targets=None -> target-free t=0 loss (one-hot path)."""
    n, c = inputs.shape
    streams = 1 if targets is None else 2
    n_pad = max(n, 128)                           # tiny batches only: cheap pad
    x = _pad_rows(inputs, n_pad)
    tm, nblocks = _row_tile(n_pad, c, streams)
    g = tm // 128

    if targets is None:
        kernel = functools.partial(_rows_f0_kernel, gamma=gamma, alpha=alpha)
        in_specs = [pl.BlockSpec((tm, c), lambda i: (i, 0))]
        operands = (x,)
    else:
        kernel = functools.partial(_rows_dense_kernel, gamma=gamma, alpha=alpha)
        in_specs = [pl.BlockSpec((tm, c), lambda i: (i, 0)),
                    pl.BlockSpec((tm, c), lambda i: (i, 0))]
        operands = (x, _pad_rows(targets, n_pad))

    out = pl.pallas_call(
        kernel,
        out_shape=jax.ShapeDtypeStruct((nblocks, g, 128), jnp.float32),
        grid_spec=pltpu.PrefetchScalarGridSpec(
            num_scalar_prefetch=0,
            grid=(nblocks,),
            in_specs=in_specs,
            out_specs=pl.BlockSpec((1, g, 128), lambda i: (i, 0, 0)),
        ),
        compiler_params=pltpu.CompilerParams(
            dimension_semantics=("parallel",),
            vmem_limit_bytes=_VMEM_LIMIT),
    )(*operands)
    return out.reshape(-1)[:n]


def _flat_partial_sums(arrays, pad_fills, elem_fn):
    """Lane-dense flattened partial sums over all elements -> (num_parts, 8, L) f32."""
    n, c = arrays[0].shape
    streams = len(arrays)

    if c % 128 == 0 and n >= 8:
        # Natural (N, C) view is already lane-dense: no relayout / padding copies.
        slabs, rows, L, n_valid_rows = list(arrays), n, c, n
    else:
        # Flatten to a (rows, _FLAT_LANES) slab. Tail is padded with logits whose
        # focal loss is exactly 0, so no per-element masking is needed for the pad.
        L = _FLAT_LANES
        total = n * c
        rows = _ceil_to(max(_cdiv(total, L), 1), 8)

        def to_slab(a, fill):
            flat = a.reshape(-1)
            pad = rows * L - total
            if pad:
                flat = jnp.concatenate(
                    [flat, jnp.full((pad,), fill, dtype=flat.dtype)])
            return flat.reshape(rows, L)

        slabs = [to_slab(a, f) for a, f in zip(arrays, pad_fills)]
        n_valid_rows = rows

    budget = _BLOCK_BYTES_1S if streams == 1 else _BLOCK_BYTES_2S
    tf = max(8, (budget // (4 * L)) // 8 * 8)
    tf = min(tf, (rows // 8) * 8)
    nblocks = _cdiv(rows, tf)

    num_parts = 2 if nblocks >= 2 else 1          # keep both v7x TensorCores busy
    bpp = _cdiv(nblocks, num_parts)

    kernel = functools.partial(_flat_sum_kernel, elem_fn=elem_fn,
                               n_rows_valid=n_valid_rows, bpp=bpp)
    in_idx = lambda p, j: (jnp.minimum(p * bpp + j, nblocks - 1), 0)

    return pl.pallas_call(
        kernel,
        out_shape=jax.ShapeDtypeStruct((num_parts, 8, L), jnp.float32),
        grid_spec=pltpu.PrefetchScalarGridSpec(
            num_scalar_prefetch=0,
            grid=(num_parts, bpp),
            in_specs=[pl.BlockSpec((tf, L), in_idx) for _ in slabs],
            out_specs=pl.BlockSpec((1, 8, L), lambda p, j: (p, 0, 0)),
        ),
        compiler_params=pltpu.CompilerParams(
            dimension_semantics=("parallel", "arbitrary"),
            vmem_limit_bytes=_VMEM_LIMIT),
    )(*slabs)


def _corr_per_row(inputs, cls, gamma, alpha):
    """Per-row correction for one-hot targets: f(x_pos, t=1) - f(x_pos, t=0)."""
    n, c = inputs.shape
    # TODO(synk): the (N,)-sized positive-logit gather is left to XLA
    # (jnp.take_along_axis); it touches only N of the N*C elements.
    xpos = jnp.take_along_axis(inputs, cls[:, None], axis=1)[:, 0].astype(jnp.float32)

    rows = _ceil_to(max(_cdiv(n, 128), 1), 8)
    pad = rows * 128 - n
    if pad:
        xpos = jnp.concatenate([xpos, jnp.zeros((pad,), dtype=xpos.dtype)])
    xp2 = xpos.reshape(rows, 128)

    rb = max(8, (_BLOCK_BYTES_1S // (4 * 128)) // 8 * 8)
    rb = min(rb, rows)
    nblocks = _cdiv(rows, rb)
    kernel = functools.partial(_corr_map_kernel, gamma=gamma, alpha=alpha,
                               n_valid=n, rb=rb)

    out = pl.pallas_call(
        kernel,
        out_shape=jax.ShapeDtypeStruct((rows, 128), jnp.float32),
        grid_spec=pltpu.PrefetchScalarGridSpec(
            num_scalar_prefetch=0,
            grid=(nblocks,),
            in_specs=[pl.BlockSpec((rb, 128), lambda i: (i, 0))],
            out_specs=pl.BlockSpec((rb, 128), lambda i: (i, 0)),
        ),
        compiler_params=pltpu.CompilerParams(
            dimension_semantics=("parallel",),
            vmem_limit_bytes=_VMEM_LIMIT),
    )(xp2)
    return out.reshape(-1)[:n]


def bce_focal_loss(inputs, targets, *, alpha=None, gamma=1.5, reduction="mean"):
    """JAX/Pallas equivalent of BCE_FocalLoss.forward (pos_weight=None)."""
    if not gamma >= 0:
        raise ValueError(f"gamma :{gamma} must be larger than 0")
    if alpha is None:
        alpha = -1.0
    if alpha > 1.0:
        raise ValueError(f"alpha :{alpha} must be float value smaller than 1 "
                         f"(alpha is off when alpha < 0 or alpha=None)")
    if reduction not in ("mean", "sum", "none"):
        raise KeyError(f"reduction: {reduction} is not supported.")
    if inputs.ndim != 2:
        raise ValueError("inputs must be (N, C)")

    gamma = float(gamma)
    alpha = float(alpha)
    n, c = inputs.shape

    # Matches the torch module: 1-D or (N, 1) targets are integer class ids.
    int_targets = targets.ndim == 1 or targets.shape[1] == 1
    if int_targets:
        cls = targets.reshape(-1).astype(jnp.int32)
    else:
        assert targets.shape == (n, c)

    if reduction == "none":
        if int_targets:
            out = (_loss_per_row(inputs, None, gamma, alpha)
                   + _corr_per_row(inputs, cls, gamma, alpha))
        else:
            out = _loss_per_row(inputs, targets, gamma, alpha)
        return out.astype(inputs.dtype)

    if int_targets:
        f0 = lambda x: _focal_binary(x, False, gamma, alpha)
        partials = _flat_partial_sums([inputs], (_PAD_X,), f0)
        total = jnp.sum(partials) + jnp.sum(_corr_per_row(inputs, cls, gamma, alpha))
    else:
        fxt = lambda x, t: _focal_dense(x, t, gamma, alpha)
        partials = _flat_partial_sums([inputs, targets], (_PAD_X, 0), fxt)
        total = jnp.sum(partials)

    if reduction == "mean":
        total = total / jnp.float32(n)
    return total.astype(inputs.dtype)


# ------------------------------------------------------------------------- reference


def _reference(inputs, targets, *, alpha=None, gamma=1.5, reduction="mean"):
    if alpha is None:
        alpha = -1.0
    if targets.ndim == 1 or targets.shape[1] == 1:
        targets = jax.nn.one_hot(targets.reshape(-1), inputs.shape[1],
                                 dtype=jnp.float32)
    x = inputs.astype(jnp.float32)
    t = targets.astype(jnp.float32)
    bce = jnp.maximum(x, 0.0) - x * t + jnp.log1p(jnp.exp(-jnp.abs(x)))
    p = jnp.exp(-bce)
    loss = (1.0 - p) ** gamma * bce
    if alpha > 0:
        loss = loss * (t * alpha + (1 - t) * (1 - alpha))
    loss = loss.sum(-1)
    if reduction == "mean":
        return loss.mean()
    if reduction == "sum":
        return loss.sum()
    return loss


if __name__ == "__main__":
    key = jax.random.PRNGKey(0)
    k_in, k_tg, k_td, k_in2, k_tg2 = jax.random.split(key, 5)

    N, C = 16, 32
    inputs = jax.random.normal(k_in, (N, C), dtype=jnp.float32)
    targets_int = jax.random.randint(k_tg, (N,), 0, C, dtype=jnp.int32)
    targets_dense = (jax.random.uniform(k_td, (N, C)) < 0.1).astype(jnp.float32)

    # Unaligned shapes exercise the ragged-block / masking paths.
    N2, C2 = 19, 10
    inputs2 = jax.random.normal(k_in2, (N2, C2), dtype=jnp.float32)
    targets2_int = jax.random.randint(k_tg2, (N2,), 0, C2, dtype=jnp.int32)

    checks = [
        (inputs, targets_int, dict(alpha=None, gamma=1.5, reduction="mean")),
        (inputs, targets_int, dict(alpha=0.25, gamma=2.0, reduction="sum")),
        (inputs, targets_int, dict(alpha=0.25, gamma=1.5, reduction="none")),
        (inputs, targets_dense, dict(alpha=0.25, gamma=1.5, reduction="mean")),
        (inputs, targets_dense, dict(alpha=None, gamma=2.0, reduction="none")),
        (inputs2, targets2_int, dict(alpha=0.25, gamma=1.5, reduction="mean")),
        (inputs2, targets2_int, dict(alpha=None, gamma=1.5, reduction="none")),
    ]
    for x, tgt, kwargs in checks:
        out = jax.block_until_ready(bce_focal_loss(x, tgt, **kwargs))
        ref = _reference(x, tgt, **kwargs)
        assert jnp.allclose(out, ref, rtol=5e-4, atol=1e-4), (kwargs, out, ref)

    print("KERNEL_OK")
</pallas_src>

<mosaic_0001>
module attributes {stable_mosaic.version = 11 : i64} {
  func.func @_flat_sum_kernel(%arg0: i32, %arg1: i32, %arg2: memref<8x512xf32, #tpu.memory_space<vmem>>, %arg3: memref<1x8x512xf32, #tpu.memory_space<vmem>>) attributes {dimension_semantics = [#tpu.dimension_semantics<parallel>, #tpu.dimension_semantics<arbitrary>], iteration_bounds = array<i64: 1, 1>, scalar_prefetch = 0 : i64, scratch_operands = 0 : i64, tpu.core_type = #tpu.core_type<tc>, window_params = [{transform_indices = @transform_0, window_bounds = array<i64: 8, 512>}, {transform_indices = @transform_1, window_bounds = array<i64: 1, 8, 512>}]} {
    %c0_i32 = arith.constant 0 : i32
    %0 = arith.cmpi eq, %arg1, %c0_i32 : i32
    %1 = arith.extui %0 : i1 to i32
    %c0_i32_0 = arith.constant 0 : i32
    %2 = arith.cmpi ne, %1, %c0_i32_0 : i32
    scf.if %2 {
      %cst_15 = arith.constant 0.000000e+00 : f32
      %44 = vector.broadcast %cst_15 : f32 to vector<1x8x512xf32>
      %c0_16 = arith.constant 0 : index
      %c0_17 = arith.constant 0 : index
      %c0_18 = arith.constant 0 : index
      %45 = vector.load %arg3[%c0_16, %c0_17, %c0_18] : memref<1x8x512xf32, #tpu.memory_space<vmem>>, vector<1x8x512xf32>
      tpu.vector_store %arg3[%c0_16, %c0_17, %c0_18], %44 {strides = array<i32>} : memref<1x8x512xf32, #tpu.memory_space<vmem>>, vector<1x8x512xf32>,
    } else {
    }
    %c0 = arith.constant 0 : index
    %c0_1 = arith.constant 0 : index
    %3 = vector.load %arg2[%c0, %c0_1] : memref<8x512xf32, #tpu.memory_space<vmem>>, vector<8x512xf32>
    %4 = math.absf %3 : vector<8x512xf32>
    %cst = arith.constant 0.000000e+00 : f32
    %5 = vector.broadcast %cst : f32 to vector<8x512xf32>
    %6 = arith.subf %5, %4 : vector<8x512xf32>
    %7 = math.exp %6 : vector<8x512xf32>
    %cst_2 = arith.constant 0.000000e+00 : f32
    %8 = vector.broadcast %cst_2 : f32 to vector<8x512xf32>
    %9 = arith.cmpf oge, %3, %8 : vector<8x512xf32>
    %cst_3 = arith.constant 0.000000e+00 : f32
    %10 = vector.broadcast %cst_3 : f32 to vector<8x512xf32>
    %11 = arith.maximumf %3, %10 : vector<8x512xf32>
    %12 = math.log1p %7 : vector<8x512xf32>
    %13 = arith.addf %11, %12 : vector<8x512xf32>
    %cst_4 = arith.constant 1.000000e+00 : f32
    %14 = vector.broadcast %cst_4 : f32 to vector<8x512xf32>
    %15 = arith.select %9, %7, %14 : vector<8x512xi1>, vector<8x512xf32>
    %cst_5 = arith.constant 1.000000e+00 : f32
    %16 = vector.broadcast %cst_5 : f32 to vector<8x512xf32>
    %17 = arith.addf %16, %7 : vector<8x512xf32>
    %18 = tpu.reciprocal %17 {approx = true} : vector<8x512xf32> -> vector<8x512xf32>
    %19 = arith.mulf %17, %18 : vector<8x512xf32>
    %cst_6 = arith.constant 2.000000e+00 : f32
    %20 = vector.broadcast %cst_6 : f32 to vector<8x512xf32>
    %21 = arith.subf %20, %19 : vector<8x512xf32>
    %22 = arith.mulf %18, %21 : vector<8x512xf32>
    %23 = arith.mulf %17, %22 : vector<8x512xf32>
    %cst_7 = arith.constant 2.000000e+00 : f32
    %24 = vector.broadcast %cst_7 : f32 to vector<8x512xf32>
    %25 = arith.subf %24, %23 : vector<8x512xf32>
    %26 = arith.mulf %22, %25 : vector<8x512xf32>
    %27 = arith.mulf %15, %26 : vector<8x512xf32>
    %cst_8 = arith.constant 1.000000e+00 : f32
    %28 = vector.broadcast %cst_8 : f32 to vector<8x512xf32>
    %29 = arith.subf %28, %27 : vector<8x512xf32>
    %30 = math.sqrt %29 : vector<8x512xf32>
    %31 = arith.mulf %29, %30 : vector<8x512xf32>
    %32 = arith.mulf %31, %13 : vector<8x512xf32>
    %c1_i32 = arith.constant 1 : i32
    %33 = arith.muli %arg0, %c1_i32 : i32
    %34 = arith.addi %33, %arg1 : i32
    %c8_i32 = arith.constant 8 : i32
    %35 = arith.muli %34, %c8_i32 : i32
    %c8_i32_9 = arith.constant 8 : i32
    %36 = arith.addi %35, %c8_i32_9 : i32
    %c8_i32_10 = arith.constant 8 : i32
    %37 = arith.cmpi sle, %36, %c8_i32_10 : i32
    %38 = arith.extui %37 : i1 to i32
    %c0_i32_11 = arith.constant 0 : i32
    %39 = arith.cmpi ne, %38, %c0_i32_11 : i32
    scf.if %39 {
      %c0_15 = arith.constant 0 : index
      %c0_16 = arith.constant 0 : index
      %c0_17 = arith.constant 0 : index
      %44 = vector.load %arg3[%c0_15, %c0_16, %c0_17] : memref<1x8x512xf32, #tpu.memory_space<vmem>>, vector<1x8x512xf32>
      %45 = vector.shape_cast %32 : vector<8x512xf32> to vector<1x8x512xf32>
      %cst_18 = arith.constant dense<0.000000e+00> : vector<8x512xf32>
      %46 = vector.multi_reduction <add>, %45, %cst_18 [0] : vector<1x8x512xf32> to vector<8x512xf32>
      %47 = vector.shape_cast %46 : vector<8x512xf32> to vector<1x8x512xf32>
      %48 = arith.addf %44, %47 : vector<1x8x512xf32>
      %c0_19 = arith.constant 0 : index
      %c0_20 = arith.constant 0 : index
      %c0_21 = arith.constant 0 : index
      %49 = vector.load %arg3[%c0_19, %c0_20, %c0_21] : memref<1x8x512xf32, #tpu.memory_space<vmem>>, vector<1x8x512xf32>
      tpu.vector_store %arg3[%c0_19, %c0_20, %c0_21], %48 {strides = array<i32>} : memref<1x8x512xf32, #tpu.memory_space<vmem>>, vector<1x8x512xf32>,
    } else {
    }
    %c8_i32_12 = arith.constant 8 : i32
    %40 = arith.addi %35, %c8_i32_12 : i32
    %c8_i32_13 = arith.constant 8 : i32
    %41 = arith.cmpi sgt, %40, %c8_i32_13 : i32
    %42 = arith.extui %41 : i1 to i32
    %c0_i32_14 = arith.constant 0 : i32
    %43 = arith.cmpi ne, %42, %c0_i32_14 : i32
    scf.if %43 {
      %44 = tpu.iota {dimensions = array<i32: 0>} : vector<8x1xi32>
      %45 = vector.broadcast %35 : i32 to vector<8x1xi32>
      %46 = arith.addi %45, %44 : vector<8x1xi32>
      %c8_i32_15 = arith.constant 8 : i32
      %47 = vector.broadcast %c8_i32_15 : i32 to vector<8x1xi32>
      %48 = arith.cmpi slt, %46, %47 : vector<8x1xi32>
      %cst_16 = arith.constant 0.000000e+00 : f32
      %49 = vector.shape_cast %48 : vector<8x1xi1> to vector<8x1xi1>
      %50 = vector.broadcast %49 : vector<8x1xi1> to vector<8x512xi1>
      %51 = vector.broadcast %cst_16 : f32 to vector<8x512xf32>
      %52 = arith.select %50, %32, %51 : vector<8x512xi1>, vector<8x512xf32>
      %c0_17 = arith.constant 0 : index
      %c0_18 = arith.constant 0 : index
      %c0_19 = arith.constant 0 : index
      %53 = vector.load %arg3[%c0_17, %c0_18, %c0_19] : memref<1x8x512xf32, #tpu.memory_space<vmem>>, vector<1x8x512xf32>
      %54 = vector.shape_cast %52 : vector<8x512xf32> to vector<1x8x512xf32>
      %cst_20 = arith.constant dense<0.000000e+00> : vector<8x512xf32>
      %55 = vector.multi_reduction <add>, %54, %cst_20 [0] : vector<1x8x512xf32> to vector<8x512xf32>
      %56 = vector.shape_cast %55 : vector<8x512xf32> to vector<1x8x512xf32>
      %57 = arith.addf %53, %56 : vector<1x8x512xf32>
      %c0_21 = arith.constant 0 : index
      %c0_22 = arith.constant 0 : index
      %c0_23 = arith.constant 0 : index
      %58 = vector.load %arg3[%c0_21, %c0_22, %c0_23] : memref<1x8x512xf32, #tpu.memory_space<vmem>>, vector<1x8x512xf32>
      tpu.vector_store %arg3[%c0_21, %c0_22, %c0_23], %57 {strides = array<i32>} : memref<1x8x512xf32, #tpu.memory_space<vmem>>, vector<1x8x512xf32>,
    } else {
    }
    return
  }
  func.func @transform_0(%arg0: i32, %arg1: i32) -> (i32, i32) {
    %c1_i32 = arith.constant 1 : i32
    %0 = arith.muli %arg0, %c1_i32 : i32
    %1 = arith.addi %0, %arg1 : i32
    %c0_i32 = arith.constant 0 : i32
    %2 = arith.minsi %1, %c0_i32 : i32
    %c0_i32_0 = arith.constant 0 : i32
    %c0_i32_1 = arith.constant 0 : i32
    return %2, %c0_i32_0 : i32, i32
  }
  func.func @transform_1(%arg0: i32, %arg1: i32) -> (i32, i32, i32) {
    %c0_i32 = arith.constant 0 : i32
    %c0_i32_0 = arith.constant 0 : i32
    %c0_i32_1 = arith.constant 0 : i32
    return %arg0, %c0_i32, %c0_i32_0 : i32, i32, i32
  }
}

</mosaic_0001>

<llo_original>
// kernel: tpu_custom_call.1
$region0: #{tpu_custom_call.1}
  #allocation0 [shape = 'u32[]', space=smem, size = 0x4, offset = 0x4, fixed_abs, tag = 'smem constant byte address 0x4 - core index']
  #allocation1 [shape = 'u32[144,128]{1,0:T(1,128)}', space=vmem, size = 0x12000, scoped, tag = 'internal scratch']
  %s0 = inlined_call_operand.hbm [shape: f32[8,512], index: 0, kind: input, shape index: {}]
  %s1 = inlined_call_operand.hbm [shape: f32[1,8,512], index: 1, kind: output, shape index: {}]
  %s2 = sld [smem:[#allocation0]]
  $region30: #{tpu_custom_call.1} parent=0
    _
  %s4 = ssub.s32 1, %s2
  %s5 = scalar_select 0, %s4, %s2
  $region1: #{tpu_custom_call.1} parent=0
    #allocation2 [shape = 'u8[16384]{0}', space=vmem, size = 0x4000, scoped, tag = 'input window, operand 0, single buffered']
    #allocation3 [shape = 's32[1]{0}', space=sflag, size = 0x4, scoped, tag = 'scoped memory for tpu_custom_call.1']
    #allocation4 [shape = 's32[1]{0}', space=sflag, size = 0x4, scoped, tag = 'scoped memory for tpu_custom_call.1']
    #allocation5 [shape = 'u8[16384]{0}', space=vmem, size = 0x4000, scoped, tag = 'output window, operand 0, single buffered']
    %6 = vsyncpa [#allocation3], 0
    %7 = vsyncpa [#allocation4], 0
    // Predicated region
    $region2: #{tpu_custom_call.1} parent=1 // pred_check
      _
    $region3: #{tpu_custom_call.1} parent=1 // pred_check_branch
      %9 = sbr.rel (0) target = $region5
    $region4: #{tpu_custom_call.1} parent=1 // pred_region
      %s10 = sadd.s32 0, 0
      %p11 = scmp.lt.s32.totalorder %s10, 0
      %s12 = scalar_select %p11, %s10, 0
      %s14 = ssub.s32 512, 512
      %15 = vsyncadd [#allocation3], %s14
      %s16 = smul.addr %s12, 4
      %s17 = smul.addr %s16, 128
      %s18 = scalar_lea.hbm %s0, %s17
      %s20 = sshll.u32 [#allocation2], 4
      %s21 = int_to_ptr.vmem [resolvable:$true] %s20
      %23 = dma.hbm_to_vmem [thread:$0]  %s18, 512, %s21, [#allocation3]
    $region5: #{tpu_custom_call.1} parent=1 // pred_fallthru
      _
    // Predicated region
    $region6: #{tpu_custom_call.1} parent=1 // pred_check
      _
    $region7: #{tpu_custom_call.1} parent=1 // pred_check_branch
      %25 = sbr.rel (0) target = $region9
    $region8: #{tpu_custom_call.1} parent=1 // pred_region
      %26 = dma.done [#allocation3], 512
    $region9: #{tpu_custom_call.1} parent=1 // pred_fallthru
      _
    %s27 = sadd.s32 0, 0
    %p28 = scmp.lt.s32.totalorder %s27, 0
    %s29 = scalar_select %p28, %s27, 0
    %p30 = scmp.eq.s32.totalorder 0, 0
    // Predicated region
    $region10: #{tpu_custom_call.1} parent=1 // pred_check
      %p31 = pneg %p30
    $region11: #{tpu_custom_call.1} parent=1 // pred_check_branch
      %33 = sbr.rel (%p31) target = $region13
    $region12: #{tpu_custom_call.1} parent=1 // pred_region
      %34 = vst [vmem:[#allocation5] sm:$0xff] 0.0
      %35 = vst [vmem:[#allocation5 + $0x8] sm:$0xff] 0.0
      %36 = vst [vmem:[#allocation5 + $0x10] sm:$0xff] 0.0
      %37 = vst [vmem:[#allocation5 + $0x18] sm:$0xff] 0.0
    $region13: #{tpu_custom_call.1} parent=1 // pred_fallthru
      _
    %v38 = vld [vmem:[#allocation2] sm:$0xff]
    %v39 = vld [vmem:[#allocation2 + $0x8] sm:$0xff]
    %v40 = vld [vmem:[#allocation2 + $0x10] sm:$0xff]
    %v41 = vld [vmem:[#allocation2 + $0x18] sm:$0xff]
    %v42 = vand.u32 2147483647, %v38
    %v43 = vand.u32 2147483647, %v39
    %v44 = vand.u32 2147483647, %v40
    %v45 = vand.u32 2147483647, %v41
    %v46 = vsub.f32 0.0, %v42
    %v47 = vsub.f32 0.0, %v43
    %v48 = vsub.f32 0.0, %v44
    %v49 = vsub.f32 0.0, %v45
    %v50 = vmul.f32 %v46, 1.442695
    %v51 = vpow.pop %v50
    %v52 = vmul.f32 %v47, 1.442695
    %v53 = vpow.pop %v52
    %v54 = vmul.f32 %v48, 1.442695
    %v55 = vpow.pop %v54
    %v56 = vmul.f32 %v49, 1.442695
    %v57 = vpow.pop %v56
    %vm58 = vcmp.ge.f32.partialorder %v38, 0.0
    %vm59 = vcmp.ge.f32.partialorder %v39, 0.0
    %vm60 = vcmp.ge.f32.partialorder %v40, 0.0
    %vm61 = vcmp.ge.f32.partialorder %v41, 0.0
    %v62 = vmax.f32 %v38, 0.0
    %v63 = vmax.f32 %v39, 0.0
    %v64 = vmax.f32 %v40, 0.0
    %v65 = vmax.f32 %v41, 0.0
    %v66 = vadd.f32 %v51, 1.0
    %v67 = vlog2.pop %v66
    %v68 = vmul.f32 %v67, 0.6931472
    %v69 = vmul.f32 -0.5, %v51
    %v70 = vadd.f32 %v69, 1.0
    %v71 = vmul.f32 %v70, %v51
    %v72 = vand.u32 2147483647, %v51
    %vm73 = vcmp.lt.f32.partialorder %v72, 0.0004427343
    %v74 = vsel %vm73, %v71, %v68
    %v75 = vadd.f32 %v53, 1.0
    %v76 = vlog2.pop %v75
    %v77 = vmul.f32 %v76, 0.6931472
    %v78 = vmul.f32 -0.5, %v53
    %v79 = vadd.f32 %v78, 1.0
    %v80 = vmul.f32 %v79, %v53
    %v81 = vand.u32 2147483647, %v53
    %vm82 = vcmp.lt.f32.partialorder %v81, 0.0004427343
    %v83 = vsel %vm82, %v80, %v77
    %v84 = vadd.f32 %v55, 1.0
    %v85 = vlog2.pop %v84
    %v86 = vmul.f32 %v85, 0.6931472
    %v87 = vmul.f32 -0.5, %v55
    %v88 = vadd.f32 %v87, 1.0
    %v89 = vmul.f32 %v88, %v55
    %v90 = vand.u32 2147483647, %v55
    %vm91 = vcmp.lt.f32.partialorder %v90, 0.0004427343
    %v92 = vsel %vm91, %v89, %v86
    %v93 = vadd.f32 %v57, 1.0
    %v94 = vlog2.pop %v93
    %v95 = vmul.f32 %v94, 0.6931472
    %v96 = vmul.f32 -0.5, %v57
    %v97 = vadd.f32 %v96, 1.0
    %v98 = vmul.f32 %v97, %v57
    %v99 = vand.u32 2147483647, %v57
    %vm100 = vcmp.lt.f32.partialorder %v99, 0.0004427343
    %v101 = vsel %vm100, %v98, %v95
    %v102 = vadd.f32 %v62, %v74
    %v103 = vadd.f32 %v63, %v83
    %v104 = vadd.f32 %v64, %v92
    %v105 = vadd.f32 %v65, %v101
    %v106 = vsel %vm58, %v51, 1.0
    %v107 = vsel %vm59, %v53, 1.0
    %v108 = vsel %vm60, %v55, 1.0
    %v109 = vsel %vm61, %v57, 1.0
    %v110 = vadd.f32 %v51, 1.0
    %v111 = vadd.f32 %v53, 1.0
    %v112 = vadd.f32 %v55, 1.0
    %v113 = vadd.f32 %v57, 1.0
    %v114 = vrcp.pop %v110
    %v115 = vrcp.pop %v111
    %v116 = vrcp.pop %v112
    %v117 = vrcp.pop %v113
    %v118 = vmul.f32 %v110, %v114
    %v119 = vmul.f32 %v111, %v115
    %v120 = vmul.f32 %v112, %v116
    %v121 = vmul.f32 %v113, %v117
    %v122 = vsub.f32 2.0, %v118
    %v123 = vsub.f32 2.0, %v119
    %v124 = vsub.f32 2.0, %v120
    %v125 = vsub.f32 2.0, %v121
    %v126 = vmul.f32 %v114, %v122
    %v127 = vmul.f32 %v115, %v123
    %v128 = vmul.f32 %v116, %v124
    %v129 = vmul.f32 %v117, %v125
    %v130 = vmul.f32 %v110, %v126
    %v131 = vmul.f32 %v111, %v127
    %v132 = vmul.f32 %v112, %v128
    %v133 = vmul.f32 %v113, %v129
    %v134 = vsub.f32 2.0, %v130
    %v135 = vsub.f32 2.0, %v131
    %v136 = vsub.f32 2.0, %v132
    %v137 = vsub.f32 2.0, %v133
    %v138 = vmul.f32 %v126, %v134
    %v139 = vmul.f32 %v127, %v135
    %v140 = vmul.f32 %v128, %v136
    %v141 = vmul.f32 %v129, %v137
    %v142 = vmul.f32 %v106, %v138
    %v143 = vmul.f32 %v107, %v139
    %v144 = vmul.f32 %v108, %v140
    %v145 = vmul.f32 %v109, %v141
    %v146 = vsub.f32 1.0, %v142
    %v147 = vsub.f32 1.0, %v143
    %v148 = vsub.f32 1.0, %v144
    %v149 = vsub.f32 1.0, %v145
    %v150 = vrsqrt.pop %v146
    %v151 = vmul.f32 %v146, %v150
    %vm152 = vcmp.eq.f32.partialorder %v146, inf
    %v153 = vsel %vm152, %v146, %v151
    %vm154 = vcmp.eq.f32.partialorder %v146, 0.0
    %v155 = vand.u32 %v146, 2147483648
    %v156 = vsel %vm154, %v155, %v153
    %v157 = vrsqrt.pop %v147
    %v158 = vmul.f32 %v147, %v157
    %vm159 = vcmp.eq.f32.partialorder %v147, inf
    %v160 = vsel %vm159, %v147, %v158
    %vm161 = vcmp.eq.f32.partialorder %v147, 0.0
    %v162 = vand.u32 %v147, 2147483648
    %v163 = vsel %vm161, %v162, %v160
    %v164 = vrsqrt.pop %v148
    %v165 = vmul.f32 %v148, %v164
    %vm166 = vcmp.eq.f32.partialorder %v148, inf
    %v167 = vsel %vm166, %v148, %v165
    %vm168 = vcmp.eq.f32.partialorder %v148, 0.0
    %v169 = vand.u32 %v148, 2147483648
    %v170 = vsel %vm168, %v169, %v167
    %v171 = vrsqrt.pop %v149
    %v172 = vmul.f32 %v149, %v171
    %vm173 = vcmp.eq.f32.partialorder %v149, inf
    %v174 = vsel %vm173, %v149, %v172
    %vm175 = vcmp.eq.f32.partialorder %v149, 0.0
    %v176 = vand.u32 %v149, 2147483648
    %v177 = vsel %vm175, %v176, %v174
    %v178 = vmul.f32 %v146, %v156
    %v179 = vmul.f32 %v147, %v163
    %v180 = vmul.f32 %v148, %v170
    %v181 = vmul.f32 %v149, %v177
    %v182 = vmul.f32 %v178, %v102
    %v183 = vmul.f32 %v179, %v103
    %v184 = vmul.f32 %v180, %v104
    %v185 = vmul.f32 %v181, %v105
    %s186 = sadd.s32 0, 0
    %s187 = smul.u32 %s186, 8
    %s188 = sadd.s32 %s187, 8
    %p189 = scmp.le.s32.totalorder %s188, 8
    // Predicated region
    $region14: #{tpu_custom_call.1} parent=1 // pred_check
      %p190 = pneg %p189
    $region15: #{tpu_custom_call.1} parent=1 // pred_check_branch
      %192 = sbr.rel (%p190) target = $region17
    $region16: #{tpu_custom_call.1} parent=1 // pred_region
      %v193 = vld [vmem:[#allocation5] sm:$0xff]
      %v194 = vld [vmem:[#allocation5 + $0x8] sm:$0xff]
      %v195 = vld [vmem:[#allocation5 + $0x10] sm:$0xff]
      %v196 = vld [vmem:[#allocation5 + $0x18] sm:$0xff]
      %v197 = vadd.f32 %v182, 0.0
      %v198 = vadd.f32 %v183, 0.0
      %v199 = vadd.f32 %v184, 0.0
      %v200 = vadd.f32 %v185, 0.0
      %v201 = vadd.f32 %v193, %v197
      %v202 = vadd.f32 %v194, %v198
      %v203 = vadd.f32 %v195, %v199
      %v204 = vadd.f32 %v196, %v200
      %205 = vst [vmem:[#allocation5] sm:$0xff] %v201
      %206 = vst [vmem:[#allocation5 + $0x8] sm:$0xff] %v202
      %207 = vst [vmem:[#allocation5 + $0x10] sm:$0xff] %v203
      %208 = vst [vmem:[#allocation5 + $0x18] sm:$0xff] %v204
    $region17: #{tpu_custom_call.1} parent=1 // pred_fallthru
      _
    %p209 = scmp.gt.s32.totalorder %s188, 8
    // Predicated region
    $region18: #{tpu_custom_call.1} parent=1 // pred_check
      %p210 = pneg %p209
    $region19: #{tpu_custom_call.1} parent=1 // pred_check_branch
      %212 = sbr.rel (%p210) target = $region21
    $region20: #{tpu_custom_call.1} parent=1 // pred_region
      %v213 = vlaneseq
      %v214 = vshrl.u32 %v213, 7
      %v215 = vstv %s187
      %v216 = vadd.s32 %v215, %v214
      %vm217 = vcmp.lt.s32.totalorder %v216, 8
      %v218 = vsel %vm217, 1, 0
      %vm219 = vcmp.eq.s32.totalorder %v218, 1
      %v220 = vsel %vm219, %v182, 0.0
      %v221 = vsel %vm219, %v183, 0.0
      %v222 = vsel %vm219, %v184, 0.0
      %v223 = vsel %vm219, %v185, 0.0
      %v224 = vld [vmem:[#allocation5] sm:$0xff]
      %v225 = vld [vmem:[#allocation5 + $0x8] sm:$0xff]
      %v226 = vld [vmem:[#allocation5 + $0x10] sm:$0xff]
      %v227 = vld [vmem:[#allocation5 + $0x18] sm:$0xff]
      %v228 = vadd.f32 %v220, 0.0
      %v229 = vadd.f32 %v221, 0.0
      %v230 = vadd.f32 %v222, 0.0
      %v231 = vadd.f32 %v223, 0.0
      %v232 = vadd.f32 %v224, %v228
      %v233 = vadd.f32 %v225, %v229
      %v234 = vadd.f32 %v226, %v230
      %v235 = vadd.f32 %v227, %v231
      %236 = vst [vmem:[#allocation5] sm:$0xff] %v232
      %237 = vst [vmem:[#allocation5 + $0x8] sm:$0xff] %v233
      %238 = vst [vmem:[#allocation5 + $0x10] sm:$0xff] %v234
      %239 = vst [vmem:[#allocation5 + $0x18] sm:$0xff] %v235
    $region21: #{tpu_custom_call.1} parent=1 // pred_fallthru
      _
    // Predicated region
    $region22: #{tpu_custom_call.1} parent=1 // pred_check
      _
    $region23: #{tpu_custom_call.1} parent=1 // pred_check_branch
      %241 = sbr.rel (0) target = $region25
    $region24: #{tpu_custom_call.1} parent=1 // pred_region
      %s243 = ssub.s32 512, 512
      %244 = vsyncadd [#allocation4], %s243
      %s246 = sshll.u32 [#allocation5], 4
      %s247 = int_to_ptr.vmem [resolvable:$true] %s246
      %249 = dma.vmem_to_hbm [thread:$0]  %s247, 512, %s1, [#allocation4]
    $region25: #{tpu_custom_call.1} parent=1 // pred_fallthru
      _
    // Predicated region
    $region26: #{tpu_custom_call.1} parent=1 // pred_check
      _
    $region27: #{tpu_custom_call.1} parent=1 // pred_check_branch
      %251 = sbr.rel (0) target = $region29
    $region28: #{tpu_custom_call.1} parent=1 // pred_region
      %252 = dma.done [#allocation4], 512
    $region29: #{tpu_custom_call.1} parent=1 // pred_fallthru
      _
    %253 = vsyncpa [#allocation3], 1
    %254 = vsyncpa [#allocation4], 1

</llo_original>
